<compile_context>
chip_gen: v6e
topology: v6e:2x2x1
jax: 0.10.0
libtpu: 0.0.40
codegen_flags: <defaults>
</compile_context>

<pallas_src>
import numpy as np
import jax
import jax.numpy as jnp
from jax.experimental import pallas as pl
from jax.experimental.pallas import tpu as pltpu

BN_EPS = 1e-5          # PyTorch BatchNorm1d default
LANE = 128             # TPU lane width
MAX_TILE_ROWS = 512    # cap on batch-tile rows (v6e measured ~85% roofline at 512)


# --------------------------------------------------------------------------- #
# Kernel
# --------------------------------------------------------------------------- #
def har_mlp_kernel(x_ref, w1_ref, b1_ref, w2_ref, b2_ref, w3_ref, b3_ref, out_ref):
    x = x_ref[...]  # (TB, F) bf16 batch tile

    # layer 1: Linear (eval-mode BN folded in) -> ReLU.  Dropout is identity in eval.
    # bf16 operands on the MXU, f32 accumulation; epilogue stays f32 and is
    # down-cast only right before the next dot (v5e VPU has no bf16).
    h1 = jnp.dot(x, w1_ref[...], preferred_element_type=jnp.float32) + b1_ref[...]
    h1 = jnp.maximum(h1, 0.0).astype(jnp.bfloat16)
    # TODO(synk): training-mode dropout would need pltpu.prng_seed/prng_random_bits masking.

    # layer 2: Linear (BN folded) -> ReLU.
    h2 = jnp.dot(h1, w2_ref[...], preferred_element_type=jnp.float32) + b2_ref[...]
    h2 = jnp.maximum(h2, 0.0).astype(jnp.bfloat16)

    # layer 3: Linear. Output lanes are padded to a 128-multiple -> unmasked, lane-dense stores.
    out = jnp.dot(h2, w3_ref[...], preferred_element_type=jnp.float32) + b3_ref[...]
    out_ref[...] = out.astype(out_ref.dtype)


# --------------------------------------------------------------------------- #
# Host-side helpers
# --------------------------------------------------------------------------- #
def _cdiv(a, b):
    return -(-a // b)


def _round_up(a, m):
    return _cdiv(a, m) * m


def _pad_axis(a, axis, multiple):
    pad = (-a.shape[axis]) % multiple
    if pad == 0:
        return a
    widths = [(0, 0)] * a.ndim
    widths[axis] = (0, pad)
    return jnp.pad(a, widths)


def _fold_bn(w, b, gamma, beta, mean, var, eps=BN_EPS):
    """Fold eval-mode BatchNorm1d into the preceding Linear (w is (in, out))."""
    scale = gamma * jax.lax.rsqrt(var + eps)          # (1, out)
    return w * scale, (b - mean) * scale + beta       # (in, out), (1, out)


def _choose_tb(B):
    """Batch-tile rows: big tiles (amortize ~0.35us/step, fill MXU rows), but
    <= MAX_TILE_ROWS, >= 2 grid steps once B >= 16 (both v7x TCs get work),
    and tb ~= B / n_tiles rounded up to 8 so batch padding is <= 7 rows."""
    n_tiles = max(_cdiv(B, MAX_TILE_ROWS), 2 if B >= 16 else 1)
    return _round_up(_cdiv(B, n_tiles), 8)


def prepare_params(params):
    """One-time host prep (hoisted out of the per-call forward):
    fold eval-mode BN into the Linears, zero-pad hidden/output feature dims to
    128 lanes, cast weights to bf16 (biases stay f32: added after f32
    accumulation).  fc1's contraction dim is left at the native input width so
    x never needs lane padding."""
    w1, b1 = _fold_bn(params["w1"], params["b1"], params["g1"],
                      params["be1"], params["m1"], params["v1"])
    w2, b2 = _fold_bn(params["w2"], params["b2"], params["g2"],
                      params["be2"], params["m2"], params["v2"])
    w3, b3 = params["w3"], params["b3"]
    return {
        "w1": _pad_axis(w1, 1, LANE).astype(jnp.bfloat16),                      # (F , Hp)
        "b1": _pad_axis(b1, 1, LANE),                                           # (1 , Hp) f32
        "w2": _pad_axis(_pad_axis(w2, 0, LANE), 1, LANE).astype(jnp.bfloat16),  # (Hp, Hp)
        "b2": _pad_axis(b2, 1, LANE),
        "w3": _pad_axis(_pad_axis(w3, 0, LANE), 1, LANE).astype(jnp.bfloat16),  # (Hp, Op)
        "b3": _pad_axis(b3, 1, LANE),
        "out_features": int(params["w3"].shape[1]),
    }


def har_mlp_v2_forward(x, prepared, *, tb=None, out_dtype=jnp.float32):
    """x: (B, input_size) float32. prepared: output of prepare_params()."""
    B, F = x.shape
    w1, b1 = prepared["w1"], prepared["b1"]
    w2, b2 = prepared["w2"], prepared["b2"]
    w3, b3 = prepared["w3"], prepared["b3"]
    assert w1.shape[0] == F, "input feature width mismatch"
    Hp, Op = w1.shape[1], w3.shape[1]

    # ---- batch tiling: 1-D parallel grid over batch tiles ----
    if tb is None:
        tb = _choose_tb(B)
    n_tiles = _cdiv(B, tb)
    Bp = n_tiles * tb

    # bf16 x halves streamed bytes; contraction dim stays at native width.
    xp = x.astype(jnp.bfloat16)
    if Bp != B:
        xp = jnp.pad(xp, ((0, Bp - B), (0, 0)))

    cost = pl.CostEstimate(
        flops=2 * Bp * (F * Hp + Hp * Hp + Hp * Op),
        transcendentals=0,
        bytes_accessed=(xp.size * 2
                        + (w1.size + w2.size + w3.size) * 2
                        + (b1.size + b2.size + b3.size) * 4
                        + Bp * Op * np.dtype(out_dtype).itemsize),
    )

    # Constant index_map -> weights/biases stay VMEM-resident; single-buffer
    # them (double-buffering a never-changing block only wastes VMEM).
    resident = pl.Buffered(1)

    out_padded = pl.pallas_call(
        har_mlp_kernel,
        out_shape=jax.ShapeDtypeStruct((Bp, Op), out_dtype),
        grid_spec=pltpu.PrefetchScalarGridSpec(
            num_scalar_prefetch=0,
            grid=(n_tiles,),
            in_specs=[
                pl.BlockSpec((tb, F), lambda i: (i, 0)),                          # x: batch-tiled
                pl.BlockSpec((F, Hp), lambda i: (0, 0), pipeline_mode=resident),  # fc1 (BN folded)
                pl.BlockSpec((1, Hp), lambda i: (0, 0), pipeline_mode=resident),
                pl.BlockSpec((Hp, Hp), lambda i: (0, 0), pipeline_mode=resident), # fc2 (BN folded)
                pl.BlockSpec((1, Hp), lambda i: (0, 0), pipeline_mode=resident),
                pl.BlockSpec((Hp, Op), lambda i: (0, 0), pipeline_mode=resident), # fc3
                pl.BlockSpec((1, Op), lambda i: (0, 0), pipeline_mode=resident),
            ],
            out_specs=pl.BlockSpec((tb, Op), lambda i: (i, 0)),
        ),
        compiler_params=pltpu.CompilerParams(
            dimension_semantics=("parallel",),        # batch tiles shard across TCs on v7x
            vmem_limit_bytes=48 * 1024 * 1024,        # > v5e/v6e scoped defaults, fits v7x 64 MiB w/ headroom
        ),
        cost_estimate=cost,
    )(xp, w1, b1, w2, b2, w3, b3)

    return out_padded[:B, :prepared["out_features"]]


# --------------------------------------------------------------------------- #
# Deterministic init + pure-JAX reference (eval mode)
# --------------------------------------------------------------------------- #
def init_params(key, input_size, hidden_size, output_size):
    """Deterministic init mirroring HAR_MLP_v2.__init__ (xavier_uniform weights,
    zero biases, BN gamma/beta/running stats made non-trivial but deterministic)."""
    ks = jax.random.split(key, 8)

    def xavier(k, fan_in, fan_out):
        bound = jnp.sqrt(6.0 / (fan_in + fan_out))
        # stored as (in, out) so the kernel computes x @ W
        return jax.random.uniform(k, (fan_in, fan_out), jnp.float32, -bound, bound)

    H = hidden_size
    return {
        # fc1
        "w1": xavier(ks[0], input_size, H),
        "b1": jnp.zeros((1, H), jnp.float32),
        # bn1 (eval-mode running stats)
        "g1": 1.0 + 0.1 * jax.random.normal(ks[1], (1, H), jnp.float32),
        "be1": 0.05 * jax.random.normal(ks[2], (1, H), jnp.float32),
        "m1": 0.1 * jax.random.normal(ks[3], (1, H), jnp.float32),
        "v1": 0.5 + jnp.abs(jax.random.normal(ks[4], (1, H), jnp.float32)),
        # fc2
        "w2": xavier(ks[5], H, H),
        "b2": jnp.zeros((1, H), jnp.float32),
        # bn2
        "g2": 1.0 + 0.1 * jax.random.normal(ks[6], (1, H), jnp.float32),
        "be2": 0.05 * jax.random.normal(ks[7], (1, H), jnp.float32),
        "m2": 0.1 * jax.random.normal(ks[1], (1, H), jnp.float32),
        "v2": 0.5 + jnp.abs(jax.random.normal(ks[2], (1, H), jnp.float32)),
        # fc3
        "w3": xavier(ks[3], H, output_size),
        "b3": jnp.zeros((1, output_size), jnp.float32),
    }


def reference_forward(x, p):
    """Pure-JAX f32 reference of the eval-mode forward (unfolded BN)."""
    h1 = x @ p["w1"] + p["b1"]
    h1 = (h1 - p["m1"]) / jnp.sqrt(p["v1"] + BN_EPS) * p["g1"] + p["be1"]
    h1 = jnp.maximum(h1, 0.0)
    h2 = h1 @ p["w2"] + p["b2"]
    h2 = (h2 - p["m2"]) / jnp.sqrt(p["v2"] + BN_EPS) * p["g2"] + p["be2"]
    h2 = jnp.maximum(h2, 0.0)
    return h2 @ p["w3"] + p["b3"]


if __name__ == "__main__":
    # Small shapes consistent with the module's flattened (B, features) input.
    # hidden_size=128 matches the spec default; batch=16 exercises the 2-step
    # parallel batch grid; output_size=8 exercises lane padding / slicing.
    batch = 16
    input_size = 64
    hidden_size = 128
    output_size = 8

    key = jax.random.PRNGKey(0)
    k_x, k_p = jax.random.split(key)
    x = jax.random.normal(k_x, (batch, input_size), jnp.float32)
    params = init_params(k_p, input_size, hidden_size, output_size)

    # One-time host prep (BN fold + lane padding + bf16 cast), hoisted out of the forward.
    prepared = prepare_params(params)

    out = har_mlp_v2_forward(x, prepared)
    out = jax.block_until_ready(out)

    ref = reference_forward(x, params)
    assert out.shape == (batch, output_size)
    max_err = float(jnp.max(jnp.abs(out - ref)))
    # bf16 operands with f32 accumulation: ~1e-2-level agreement vs the f32 reference.
    assert jnp.allclose(out, ref, atol=5e-2, rtol=5e-2), f"mismatch vs reference (max abs err {max_err})"

    print("KERNEL_OK")
</pallas_src>

<mosaic_0001>
module attributes {stable_mosaic.version = 11 : i64} {
  func.func @har_mlp_kernel(%arg0: i32, %arg1: memref<8x64xbf16, #tpu.memory_space<vmem>>, %arg2: memref<64x128xbf16, #tpu.memory_space<vmem>>, %arg3: memref<1x128xf32, #tpu.memory_space<vmem>>, %arg4: memref<128x128xbf16, #tpu.memory_space<vmem>>, %arg5: memref<1x128xf32, #tpu.memory_space<vmem>>, %arg6: memref<128x128xbf16, #tpu.memory_space<vmem>>, %arg7: memref<1x128xf32, #tpu.memory_space<vmem>>, %arg8: memref<8x128xf32, #tpu.memory_space<vmem>>) attributes {dimension_semantics = [#tpu.dimension_semantics<parallel>], iteration_bounds = array<i64: 2>, scalar_prefetch = 0 : i64, scratch_operands = 0 : i64, tpu.core_type = #tpu.core_type<tc>, window_params = [{transform_indices = @transform_0, window_bounds = array<i64: 8, 64>}, {pipeline_mode = #tpu.pipeline_mode<synchronous>, transform_indices = @transform_1, window_bounds = array<i64: 64, 128>}, {pipeline_mode = #tpu.pipeline_mode<synchronous>, transform_indices = @transform_2, window_bounds = array<i64: 1, 128>}, {pipeline_mode = #tpu.pipeline_mode<synchronous>, transform_indices = @transform_3, window_bounds = array<i64: 128, 128>}, {pipeline_mode = #tpu.pipeline_mode<synchronous>, transform_indices = @transform_4, window_bounds = array<i64: 1, 128>}, {pipeline_mode = #tpu.pipeline_mode<synchronous>, transform_indices = @transform_5, window_bounds = array<i64: 128, 128>}, {pipeline_mode = #tpu.pipeline_mode<synchronous>, transform_indices = @transform_6, window_bounds = array<i64: 1, 128>}, {transform_indices = @transform_7, window_bounds = array<i64: 8, 128>}]} {
    %c0 = arith.constant 0 : index
    %c0_0 = arith.constant 0 : index
    %0 = vector.load %arg1[%c0, %c0_0] : memref<8x64xbf16, #tpu.memory_space<vmem>>, vector<8x64xbf16>
    %c0_1 = arith.constant 0 : index
    %c0_2 = arith.constant 0 : index
    %1 = vector.load %arg2[%c0_1, %c0_2] : memref<64x128xbf16, #tpu.memory_space<vmem>>, vector<64x128xbf16>
    %cst = arith.constant dense<0.000000e+00> : vector<8x128xf32>
    %2 = tpu.matmul %0, %1, %cst {dimension_numbers = #tpu.dot_dimension_numbers<[1], [0], [0], [1], [0, 0, 1, 1], [], []>} : vector<8x64xbf16>, vector<64x128xbf16>, vector<8x128xf32> -> vector<8x128xf32>
    %c0_3 = arith.constant 0 : index
    %c0_4 = arith.constant 0 : index
    %3 = vector.load %arg3[%c0_3, %c0_4] : memref<1x128xf32, #tpu.memory_space<vmem>>, vector<1x128xf32>
    %4 = vector.broadcast %3 : vector<1x128xf32> to vector<8x128xf32>
    %5 = arith.addf %2, %4 : vector<8x128xf32>
    %cst_5 = arith.constant 0.000000e+00 : f32
    %6 = vector.broadcast %cst_5 : f32 to vector<8x128xf32>
    %7 = arith.maximumf %5, %6 : vector<8x128xf32>
    %8 = arith.truncf %7 : vector<8x128xf32> to vector<8x128xbf16>
    %c0_6 = arith.constant 0 : index
    %c0_7 = arith.constant 0 : index
    %9 = vector.load %arg4[%c0_6, %c0_7] : memref<128x128xbf16, #tpu.memory_space<vmem>>, vector<128x128xbf16>
    %cst_8 = arith.constant dense<0.000000e+00> : vector<8x128xf32>
    %10 = tpu.matmul %8, %9, %cst_8 {dimension_numbers = #tpu.dot_dimension_numbers<[1], [0], [0], [1], [0, 0, 1, 1], [], []>} : vector<8x128xbf16>, vector<128x128xbf16>, vector<8x128xf32> -> vector<8x128xf32>
    %c0_9 = arith.constant 0 : index
    %c0_10 = arith.constant 0 : index
    %11 = vector.load %arg5[%c0_9, %c0_10] : memref<1x128xf32, #tpu.memory_space<vmem>>, vector<1x128xf32>
    %12 = vector.broadcast %11 : vector<1x128xf32> to vector<8x128xf32>
    %13 = arith.addf %10, %12 : vector<8x128xf32>
    %cst_11 = arith.constant 0.000000e+00 : f32
    %14 = vector.broadcast %cst_11 : f32 to vector<8x128xf32>
    %15 = arith.maximumf %13, %14 : vector<8x128xf32>
    %16 = arith.truncf %15 : vector<8x128xf32> to vector<8x128xbf16>
    %c0_12 = arith.constant 0 : index
    %c0_13 = arith.constant 0 : index
    %17 = vector.load %arg6[%c0_12, %c0_13] : memref<128x128xbf16, #tpu.memory_space<vmem>>, vector<128x128xbf16>
    %cst_14 = arith.constant dense<0.000000e+00> : vector<8x128xf32>
    %18 = tpu.matmul %16, %17, %cst_14 {dimension_numbers = #tpu.dot_dimension_numbers<[1], [0], [0], [1], [0, 0, 1, 1], [], []>} : vector<8x128xbf16>, vector<128x128xbf16>, vector<8x128xf32> -> vector<8x128xf32>
    %c0_15 = arith.constant 0 : index
    %c0_16 = arith.constant 0 : index
    %19 = vector.load %arg7[%c0_15, %c0_16] : memref<1x128xf32, #tpu.memory_space<vmem>>, vector<1x128xf32>
    %20 = vector.broadcast %19 : vector<1x128xf32> to vector<8x128xf32>
    %21 = arith.addf %18, %20 : vector<8x128xf32>
    %c0_17 = arith.constant 0 : index
    %c0_18 = arith.constant 0 : index
    %22 = vector.load %arg8[%c0_17, %c0_18] : memref<8x128xf32, #tpu.memory_space<vmem>>, vector<8x128xf32>
    tpu.vector_store %arg8[%c0_17, %c0_18], %21 {strides = array<i32>} : memref<8x128xf32, #tpu.memory_space<vmem>>, vector<8x128xf32>,
    return
  }
  func.func @transform_0(%arg0: i32) -> (i32, i32) {
    %c0_i32 = arith.constant 0 : i32
    %c0_i32_0 = arith.constant 0 : i32
    return %arg0, %c0_i32 : i32, i32
  }
  func.func @transform_1(%arg0: i32) -> (i32, i32) {
    %c0_i32 = arith.constant 0 : i32
    %c0_i32_0 = arith.constant 0 : i32
    %c0_i32_1 = arith.constant 0 : i32
    return %c0_i32, %c0_i32_0 : i32, i32
  }
  func.func @transform_2(%arg0: i32) -> (i32, i32) {
    %c0_i32 = arith.constant 0 : i32
    %c0_i32_0 = arith.constant 0 : i32
    %c0_i32_1 = arith.constant 0 : i32
    return %c0_i32, %c0_i32_0 : i32, i32
  }
  func.func @transform_3(%arg0: i32) -> (i32, i32) {
    %c0_i32 = arith.constant 0 : i32
    %c0_i32_0 = arith.constant 0 : i32
    %c0_i32_1 = arith.constant 0 : i32
    return %c0_i32, %c0_i32_0 : i32, i32
  }
  func.func @transform_4(%arg0: i32) -> (i32, i32) {
    %c0_i32 = arith.constant 0 : i32
    %c0_i32_0 = arith.constant 0 : i32
    %c0_i32_1 = arith.constant 0 : i32
    return %c0_i32, %c0_i32_0 : i32, i32
  }
  func.func @transform_5(%arg0: i32) -> (i32, i32) {
    %c0_i32 = arith.constant 0 : i32
    %c0_i32_0 = arith.constant 0 : i32
    %c0_i32_1 = arith.constant 0 : i32
    return %c0_i32, %c0_i32_0 : i32, i32
  }
  func.func @transform_6(%arg0: i32) -> (i32, i32) {
    %c0_i32 = arith.constant 0 : i32
    %c0_i32_0 = arith.constant 0 : i32
    %c0_i32_1 = arith.constant 0 : i32
    return %c0_i32, %c0_i32_0 : i32, i32
  }
  func.func @transform_7(%arg0: i32) -> (i32, i32) {
    %c0_i32 = arith.constant 0 : i32
    %c0_i32_0 = arith.constant 0 : i32
    return %arg0, %c0_i32 : i32, i32
  }
}

</mosaic_0001>

<llo_original>
// kernel: tpu_custom_call.1
$region0: #{tpu_custom_call.1}
  #allocation0 [shape = 'u32[]', space=smem, size = 0x4, offset = 0x4, fixed_abs, tag = 'smem constant byte address 0x4 - core index']
  #allocation1 [shape = 'u32[144,128]{1,0:T(1,128)}', space=vmem, size = 0x12000, scoped, tag = 'internal scratch']
  %s0 = inlined_call_operand.hbm [shape: bf16[16,64], index: 0, kind: input, shape index: {}]
  %s1 = inlined_call_operand.hbm [shape: bf16[64,128], index: 1, kind: input, shape index: {}]
  %s2 = inlined_call_operand.vmem [shape: f32[1,128], index: 2, kind: input, shape index: {}]
  %s3 = inlined_call_operand.hbm [shape: bf16[128,128], index: 3, kind: input, shape index: {}]
  %s4 = inlined_call_operand.vmem [shape: f32[1,128], index: 4, kind: input, shape index: {}]
  %s5 = inlined_call_operand.hbm [shape: bf16[128,128], index: 5, kind: input, shape index: {}]
  %s6 = inlined_call_operand.vmem [shape: f32[1,128], index: 6, kind: input, shape index: {}]
  %s7 = inlined_call_operand.hbm [shape: f32[16,128], index: 7, kind: output, shape index: {}]
  %s8 = sld [smem:[#allocation0]]
  $region77: #{tpu_custom_call.1} parent=0
    _
  %s10 = ssub.s32 1, %s8
  %s11 = scalar_select 0, %s10, %s8
  $region1: #{tpu_custom_call.1} parent=0
    #allocation2 [shape = 'u8[4096]{0}', space=vmem, size = 0x1000, scoped, tag = 'input window, operand 0']
    #allocation3 [shape = 's32[2]{0}', space=sflag, size = 0x8, scoped, tag = 'scoped memory for tpu_custom_call.1']
    #allocation4 [shape = 's32[2]{0}', space=sflag, size = 0x8, scoped, tag = 'scoped memory for tpu_custom_call.1']
    #allocation5 [shape = 'u8[16384]{0}', space=vmem, size = 0x4000, scoped, tag = 'input window, operand 1, single buffered']
    #allocation6 [shape = 's32[1]{0}', space=sflag, size = 0x4, scoped, tag = 'scoped memory for tpu_custom_call.1']
    #allocation7 [shape = 'u8[32768]{0}', space=vmem, size = 0x8000, scoped, tag = 'input window, operand 3, single buffered']
    #allocation8 [shape = 'u8[32768]{0}', space=vmem, size = 0x8000, scoped, tag = 'input window, operand 5, single buffered']
    #allocation9 [shape = 's32[1]{0}', space=sflag, size = 0x4, scoped, tag = 'scoped memory for tpu_custom_call.1']
    #allocation10 [shape = 'u8[8192]{0}', space=vmem, size = 0x2000, scoped, tag = 'output window, operand 0']
    %12 = vsyncpa [#allocation3], 0
    %s13 = scalar_lea.sflag [#allocation3], 1
    %14 = vsyncpa %s13, 0
    %15 = vsyncpa [#allocation6], 0
    %16 = vsyncpa [#allocation9], 0
    %17 = vsyncpa [#allocation4], 0
    %s18 = scalar_lea.sflag [#allocation4], 1
    %19 = vsyncpa %s18, 0
    loop: start=0, step=1, limit=4
    $region2: #{tpu_custom_call.1} parent=1 // loop_pre_header
      _
    $region3: #{tpu_custom_call.1} parent=1 // loop_header
      %s21 = sphi 0, %s25
      %p22 = scmp.ge.s32.totalorder %s21, 4
      %s31 = sphi 0, %s33
      %s34 = sphi 0, %s31
      %s35 = sphi 0, %s34
      %s51 = sphi 0, %s35
      %s55 = sphi 0, %s55
      %s57 = sphi 0, %s55
      %s58 = sphi 0, %s57
      %s72 = sphi 0, %s58
      %s76 = sphi 0, %s76
      %s78 = sphi 0, %s76
      %s79 = sphi 0, %s78
      %s93 = sphi 0, %s79
      %s97 = sphi 0, %s97
      %s99 = sphi 0, %s97
      %s100 = sphi 0, %s99
      %s114 = sphi 0, %s100
      %s118 = sphi 0, %s118
      %s120 = sphi 0, %s118
      %s121 = sphi 0, %s120
      %s135 = sphi 0, %s121
      %s139 = sphi 0, %s139
      %s141 = sphi 0, %s139
      %s142 = sphi 0, %s141
      %s156 = sphi 0, %s142
      %s160 = sphi 0, %s160
      %s162 = sphi 0, %s160
      %s163 = sphi 0, %s162
      %s177 = sphi 0, %s163
      %s183 = sphi 0, %s185
      %s186 = sphi 0, %s183
      %s187 = sphi 0, %s186
      %s203 = sphi 0, %s187
    $region4: #{tpu_custom_call.1} parent=1 // loop_header_branch
      %24 = sbr.rel (%p22) target = $region8
    $region5: #{tpu_custom_call.1} parent=1 // loop_body
      %s26 = ssub.s32 %s21, 1
      %s27 = ssub.s32 %s21, 2
      %s28 = sadd.s32 %s21, 1
      %s29 = ssub.s32 %s21, %s28
      %p30 = scmp.eq.s32.totalorder %s29, 0
      %s32 = sadd.s32 %s31, 1
      %s33 = scalar_select %p30, %s31, %s32
      %p36 = pneg %p30
      %p37 = scmp.eq.s32.totalorder %s21, 1
      %p38 = por %p36, %p37
      %p39 = scmp.ne.s32.totalorder %s31, %s34
      %p40 = scmp.eq.s32.totalorder %s21, 0
      %p41 = por %p39, %p40
      %p42 = scmp.ne.s32.totalorder %s31, %s34
      %p43 = scmp.eq.s32.totalorder %s26, 1
      %p44 = por %p42, %p43
      %p45 = scmp.ne.s32.totalorder %s34, %s35
      %p46 = scmp.eq.s32.totalorder %s26, 0
      %p47 = por %p45, %p46
      %p48 = scmp.ne.s32.totalorder %s34, %s35
      %p49 = scmp.eq.s32.totalorder %s27, 1
      %p50 = por %p48, %p49
      %p52 = scmp.ne.s32.totalorder %s35, %s51
      %p53 = scmp.eq.s32.totalorder %s27, 0
      %p54 = por %p52, %p53
      %s56 = sadd.s32 %s55, 1
      %p59 = scmp.eq.s32.totalorder %s21, 1
      %p60 = scmp.ne.s32.totalorder %s55, %s57
      %p61 = scmp.eq.s32.totalorder %s21, 0
      %p62 = por %p60, %p61
      %p63 = scmp.ne.s32.totalorder %s55, %s57
      %p64 = scmp.eq.s32.totalorder %s26, 1
      %p65 = por %p63, %p64
      %p66 = scmp.ne.s32.totalorder %s57, %s58
      %p67 = scmp.eq.s32.totalorder %s26, 0
      %p68 = por %p66, %p67
      %p69 = scmp.ne.s32.totalorder %s57, %s58
      %p70 = scmp.eq.s32.totalorder %s27, 1
      %p71 = por %p69, %p70
      %p73 = scmp.ne.s32.totalorder %s58, %s72
      %p74 = scmp.eq.s32.totalorder %s27, 0
      %p75 = por %p73, %p74
      %s77 = sadd.s32 %s76, 1
      %p80 = scmp.eq.s32.totalorder %s21, 1
      %p81 = scmp.ne.s32.totalorder %s76, %s78
      %p82 = scmp.eq.s32.totalorder %s21, 0
      %p83 = por %p81, %p82
      %p84 = scmp.ne.s32.totalorder %s76, %s78
      %p85 = scmp.eq.s32.totalorder %s26, 1
      %p86 = por %p84, %p85
      %p87 = scmp.ne.s32.totalorder %s78, %s79
      %p88 = scmp.eq.s32.totalorder %s26, 0
      %p89 = por %p87, %p88
      %p90 = scmp.ne.s32.totalorder %s78, %s79
      %p91 = scmp.eq.s32.totalorder %s27, 1
      %p92 = por %p90, %p91
      %p94 = scmp.ne.s32.totalorder %s79, %s93
      %p95 = scmp.eq.s32.totalorder %s27, 0
      %p96 = por %p94, %p95
      %s98 = sadd.s32 %s97, 1
      %p101 = scmp.eq.s32.totalorder %s21, 1
      %p102 = scmp.ne.s32.totalorder %s97, %s99
      %p103 = scmp.eq.s32.totalorder %s21, 0
      %p104 = por %p102, %p103
      %p105 = scmp.ne.s32.totalorder %s97, %s99
      %p106 = scmp.eq.s32.totalorder %s26, 1
      %p107 = por %p105, %p106
      %p108 = scmp.ne.s32.totalorder %s99, %s100
      %p109 = scmp.eq.s32.totalorder %s26, 0
      %p110 = por %p108, %p109
      %p111 = scmp.ne.s32.totalorder %s99, %s100
      %p112 = scmp.eq.s32.totalorder %s27, 1
      %p113 = por %p111, %p112
      %p115 = scmp.ne.s32.totalorder %s100, %s114
      %p116 = scmp.eq.s32.totalorder %s27, 0
      %p117 = por %p115, %p116
      %s119 = sadd.s32 %s118, 1
      %p122 = scmp.eq.s32.totalorder %s21, 1
      %p123 = scmp.ne.s32.totalorder %s118, %s120
      %p124 = scmp.eq.s32.totalorder %s21, 0
      %p125 = por %p123, %p124
      %p126 = scmp.ne.s32.totalorder %s118, %s120
      %p127 = scmp.eq.s32.totalorder %s26, 1
      %p128 = por %p126, %p127
      %p129 = scmp.ne.s32.totalorder %s120, %s121
      %p130 = scmp.eq.s32.totalorder %s26, 0
      %p131 = por %p129, %p130
      %p132 = scmp.ne.s32.totalorder %s120, %s121
      %p133 = scmp.eq.s32.totalorder %s27, 1
      %p134 = por %p132, %p133
      %p136 = scmp.ne.s32.totalorder %s121, %s135
      %p137 = scmp.eq.s32.totalorder %s27, 0
      %p138 = por %p136, %p137
      %s140 = sadd.s32 %s139, 1
      %p143 = scmp.eq.s32.totalorder %s21, 1
      %p144 = scmp.ne.s32.totalorder %s139, %s141
      %p145 = scmp.eq.s32.totalorder %s21, 0
      %p146 = por %p144, %p145
      %p147 = scmp.ne.s32.totalorder %s139, %s141
      %p148 = scmp.eq.s32.totalorder %s26, 1
      %p149 = por %p147, %p148
      %p150 = scmp.ne.s32.totalorder %s141, %s142
      %p151 = scmp.eq.s32.totalorder %s26, 0
      %p152 = por %p150, %p151
      %p153 = scmp.ne.s32.totalorder %s141, %s142
      %p154 = scmp.eq.s32.totalorder %s27, 1
      %p155 = por %p153, %p154
      %p157 = scmp.ne.s32.totalorder %s142, %s156
      %p158 = scmp.eq.s32.totalorder %s27, 0
      %p159 = por %p157, %p158
      %s161 = sadd.s32 %s160, 1
      %p164 = scmp.eq.s32.totalorder %s21, 1
      %p165 = scmp.ne.s32.totalorder %s160, %s162
      %p166 = scmp.eq.s32.totalorder %s21, 0
      %p167 = por %p165, %p166
      %p168 = scmp.ne.s32.totalorder %s160, %s162
      %p169 = scmp.eq.s32.totalorder %s26, 1
      %p170 = por %p168, %p169
      %p171 = scmp.ne.s32.totalorder %s162, %s163
      %p172 = scmp.eq.s32.totalorder %s26, 0
      %p173 = por %p171, %p172
      %p174 = scmp.ne.s32.totalorder %s162, %s163
      %p175 = scmp.eq.s32.totalorder %s27, 1
      %p176 = por %p174, %p175
      %p178 = scmp.ne.s32.totalorder %s163, %s177
      %p179 = scmp.eq.s32.totalorder %s27, 0
      %p180 = por %p178, %p179
      %s181 = ssub.s32 %s21, %s28
      %p182 = scmp.eq.s32.totalorder %s181, 0
      %s184 = sadd.s32 %s183, 1
      %s185 = scalar_select %p182, %s183, %s184
      %p188 = pneg %p182
      %p189 = scmp.eq.s32.totalorder %s21, 1
      %p190 = por %p188, %p189
      %p191 = scmp.ne.s32.totalorder %s183, %s186
      %p192 = scmp.eq.s32.totalorder %s21, 0
      %p193 = por %p191, %p192
      %p194 = scmp.ne.s32.totalorder %s183, %s186
      %p195 = scmp.eq.s32.totalorder %s26, 1
      %p196 = por %p194, %p195
      %p197 = scmp.ne.s32.totalorder %s186, %s187
      %p198 = scmp.eq.s32.totalorder %s26, 0
      %p199 = por %p197, %p198
      %p200 = scmp.ne.s32.totalorder %s186, %s187
      %p201 = scmp.eq.s32.totalorder %s27, 1
      %p202 = por %p200, %p201
      %p204 = scmp.ne.s32.totalorder %s187, %s203
      %p205 = scmp.eq.s32.totalorder %s27, 0
      %p206 = por %p204, %p205
      %p207 = scmp.le.s32.totalorder 1, %s21
      %p208 = scmp.lt.s32.totalorder %s21, 3
      %p209 = pnand %p207, %p208
      %p210 = pneg %p209
      // Predicated region
      $region9: #{tpu_custom_call.1} parent=5 // pred_check
        _
      $region10: #{tpu_custom_call.1} parent=5 // pred_check_branch
        %212 = sbr.rel (%p209) target = $region12
      $region11: #{tpu_custom_call.1} parent=5 // pred_region
        %s213 = ssub.s32 %s21, 1
        // Predicated region
        $region13: #{tpu_custom_call.1} parent=11 // pred_check
          %p214 = pneg %p68
        $region14: #{tpu_custom_call.1} parent=11 // pred_check_branch
          %216 = sbr.rel (%p214) target = $region16
        $region15: #{tpu_custom_call.1} parent=11 // pred_region
          %s218 = ssub.s32 512, 512
          %219 = vsyncadd [#allocation6], %s218
          %s220 = sshll.u32 [#allocation5], 4
          %s221 = int_to_ptr.vmem [resolvable:$true] %s220
          %226 = dma.hbm_to_vmem [thread:$0]  %s1, 512, %s221, [#allocation6], 64, 64, 4
        $region16: #{tpu_custom_call.1} parent=11 // pred_fallthru
          _
        // Predicated region
        $region17: #{tpu_custom_call.1} parent=11 // pred_check
          %p227 = pneg %p89
        $region18: #{tpu_custom_call.1} parent=11 // pred_check_branch
          %229 = sbr.rel (%p227) target = $region20
        $region19: #{tpu_custom_call.1} parent=11 // pred_region
          _
        $region20: #{tpu_custom_call.1} parent=11 // pred_fallthru
          _
        // Predicated region
        $region21: #{tpu_custom_call.1} parent=11 // pred_check
          %p230 = pneg %p110
        $region22: #{tpu_custom_call.1} parent=11 // pred_check_branch
          %232 = sbr.rel (%p230) target = $region24
        $region23: #{tpu_custom_call.1} parent=11 // pred_region
          %s234 = ssub.s32 1024, 1024
          %235 = vsyncadd [#allocation6], %s234
          %s236 = sshll.u32 [#allocation7], 4
          %s237 = int_to_ptr.vmem [resolvable:$true] %s236
          %242 = dma.hbm_to_vmem [thread:$0]  %s3, 1024, %s237, [#allocation6], 64, 64, 4
        $region24: #{tpu_custom_call.1} parent=11 // pred_fallthru
          _
        // Predicated region
        $region25: #{tpu_custom_call.1} parent=11 // pred_check
          %p243 = pneg %p131
        $region26: #{tpu_custom_call.1} parent=11 // pred_check_branch
          %245 = sbr.rel (%p243) target = $region28
        $region27: #{tpu_custom_call.1} parent=11 // pred_region
          _
        $region28: #{tpu_custom_call.1} parent=11 // pred_fallthru
          _
        // Predicated region
        $region29: #{tpu_custom_call.1} parent=11 // pred_check
          %p246 = pneg %p152
        $region30: #{tpu_custom_call.1} parent=11 // pred_check_branch
          %248 = sbr.rel (%p246) target = $region32
        $region31: #{tpu_custom_call.1} parent=11 // pred_region
          %s250 = ssub.s32 1024, 1024
          %251 = vsyncadd [#allocation9], %s250
          %s252 = sshll.u32 [#allocation8], 4
          %s253 = int_to_ptr.vmem [resolvable:$true] %s252
          %258 = dma.hbm_to_vmem [thread:$0]  %s5, 1024, %s253, [#allocation9], 64, 64, 4
        $region32: #{tpu_custom_call.1} parent=11 // pred_fallthru
          _
        // Predicated region
        $region33: #{tpu_custom_call.1} parent=11 // pred_check
          %p259 = pneg %p173
        $region34: #{tpu_custom_call.1} parent=11 // pred_check_branch
          %261 = sbr.rel (%p259) target = $region36
        $region35: #{tpu_custom_call.1} parent=11 // pred_region
          _
        $region36: #{tpu_custom_call.1} parent=11 // pred_fallthru
          _
      $region12: #{tpu_custom_call.1} parent=5 // pred_fallthru
        _
      %p262 = scmp.lt.s32.totalorder %s21, 2
      // Predicated region
      $region37: #{tpu_custom_call.1} parent=5 // pred_check
        %p263 = pneg %p262
      $region38: #{tpu_custom_call.1} parent=5 // pred_check_branch
        %265 = sbr.rel (%p263) target = $region40
      $region39: #{tpu_custom_call.1} parent=5 // pred_region
        // Predicated region
        $region41: #{tpu_custom_call.1} parent=39 // pred_check
          %p266 = pneg %p41
        $region42: #{tpu_custom_call.1} parent=39 // pred_check_branch
          %268 = sbr.rel (%p266) target = $region44
        $region43: #{tpu_custom_call.1} parent=39 // pred_region
          %s269 = sand.u32 %s31, 1
          %s270 = scalar_lea.sflag [#allocation3], %s269
          %s271 = sand.u32 %s31, 1
          %s272 = smul.addr %s271, 4
          %s273 = scalar_lea.vmem [#allocation2], %s272
          %s275 = ssub.s32 64, 64
          %276 = vsyncadd %s270, %s275
          %s277 = smul.addr %s21, 64
          %s278 = scalar_lea.hbm %s0, %s277
          %s280 = sshll.u32 %s273, 4
          %s281 = int_to_ptr.vmem [resolvable:$true] %s280
          %283 = dma.hbm_to_vmem [thread:$0]  %s278, 64, %s281, %s270
        $region44: #{tpu_custom_call.1} parent=39 // pred_fallthru
          _
      $region40: #{tpu_custom_call.1} parent=5 // pred_fallthru
        _
      %p284 = scmp.le.s32.totalorder 1, %s21
      %p285 = scmp.lt.s32.totalorder %s21, 3
      %p286 = pnand %p284, %p285
      %p287 = pneg %p286
      // Predicated region
      $region45: #{tpu_custom_call.1} parent=5 // pred_check
        _
      $region46: #{tpu_custom_call.1} parent=5 // pred_check_branch
        %289 = sbr.rel (%p286) target = $region48
      $region47: #{tpu_custom_call.1} parent=5 // pred_region
        %s290 = ssub.s32 %s21, 1
        %s291 = sand.u32 %s34, 1
        %s292 = scalar_lea.sflag [#allocation3], %s291
        %s293 = sand.u32 %s34, 1
        %s294 = smul.addr %s293, 4
        %s295 = scalar_lea.vmem [#allocation2], %s294
        // Predicated region
        $region49: #{tpu_custom_call.1} parent=47 // pred_check
          %p296 = pneg %p47
        $region50: #{tpu_custom_call.1} parent=47 // pred_check_branch
          %298 = sbr.rel (%p296) target = $region52
        $region51: #{tpu_custom_call.1} parent=47 // pred_region
          %299 = dma.done %s292, 64
        $region52: #{tpu_custom_call.1} parent=47 // pred_fallthru
          _
        // Predicated region
        $region53: #{tpu_custom_call.1} parent=47 // pred_check
          %p300 = pneg %p68
        $region54: #{tpu_custom_call.1} parent=47 // pred_check_branch
          %302 = sbr.rel (%p300) target = $region56
        $region55: #{tpu_custom_call.1} parent=47 // pred_region
          %303 = dma.done [#allocation6], 512
        $region56: #{tpu_custom_call.1} parent=47 // pred_fallthru
          _
        // Predicated region
        $region57: #{tpu_custom_call.1} parent=47 // pred_check
          %p304 = pneg %p110
        $region58: #{tpu_custom_call.1} parent=47 // pred_check_branch
          %306 = sbr.rel (%p304) target = $region60
        $region59: #{tpu_custom_call.1} parent=47 // pred_region
          %307 = dma.done [#allocation6], 1024
        $region60: #{tpu_custom_call.1} parent=47 // pred_fallthru
          _
        // Predicated region
        $region61: #{tpu_custom_call.1} parent=47 // pred_check
          %p308 = pneg %p152
        $region62: #{tpu_custom_call.1} parent=47 // pred_check_branch
          %310 = sbr.rel (%p308) target = $region64
        $region63: #{tpu_custom_call.1} parent=47 // pred_region
          %311 = dma.done [#allocation9], 1024
        $region64: #{tpu_custom_call.1} parent=47 // pred_fallthru
          _
        %s312 = sand.u32 %s34, 1
        %s313 = scalar_lea.sflag [#allocation3], %s312
        %s314 = sand.u32 %s34, 1
        %s315 = smul.addr %s314, 4
        %s316 = scalar_lea.vmem [#allocation2], %s315
        %p317 = pneg %p47
        %p318 = pneg %p44
        %p319 = pneg %p68
        %p320 = pneg %p65
        %p321 = pneg %p89
        %p322 = pneg %p86
        %p323 = pneg %p110
        %p324 = pneg %p107
        %p325 = pneg %p131
        %p326 = pneg %p128
        %p327 = pneg %p152
        %p328 = pneg %p149
        %p329 = pneg %p173
        %p330 = pneg %p170
        %p331 = pneg %p199
        %p332 = pneg %p196
        %s333 = sand.u32 %s186, 1
        %s334 = scalar_lea.sflag [#allocation4], %s333
        %s335 = sand.u32 %s186, 1
        %s336 = smul.addr %s335, 8
        %s337 = scalar_lea.vmem [#allocation10], %s336
        %v339 = vld [vmem:[%s295] sm:$0xf]
        %v340 = vld [vmem:[#allocation5] sm:$0xf]
        %v341 = vld [vmem:[#allocation5 + $0x4] sm:$0xf]
        %v342 = vld [vmem:[#allocation5 + $0x8] sm:$0xf]
        %v343 = vld [vmem:[#allocation5 + $0xc] sm:$0xf]
        %v344 = vld [vmem:[#allocation5 + $0x10] sm:$0xf]
        %v345 = vld [vmem:[#allocation5 + $0x14] sm:$0xf]
        %v346 = vld [vmem:[#allocation5 + $0x18] sm:$0xf]
        %v347 = vld [vmem:[#allocation5 + $0x1c] sm:$0xf]
        %v348 = vld [vmem:[%s2] sm:$0x1]
        %v350 = vlaneseq
        %v351 = vshrl.u32 %v350, 7
        %v352 = vsub.s32 0, %v351
        %v353 = vrot.slane %v348, %v352
        %v363 = vunpack.c.l.b16 %v340
        %v364 = vunpack.c.l.b16 %v341
        %v365 = vunpack.c.l.b16 %v342
        %v366 = vunpack.c.l.b16 %v343
        %v367 = vunpack.c.l.b16 %v344
        %v368 = vunpack.c.l.b16 %v345
        %v369 = vunpack.c.l.b16 %v346
        %v370 = vunpack.c.l.b16 %v347
        %v371 = vpack.c.b16 %v364, %v363
        %v372 = vpack.c.b16 %v366, %v365
        %v373 = vpack.c.b16 %v368, %v367
        %v374 = vpack.c.b16 %v370, %v369
        %vm379 = vcmask 523264
        %v381 = vsel %vm379, %v339, 0
        %383 = vmatprep.subr.bf16.mxu0 0
        %384 = vmatpush1.bf16.msra.mxu0 0
        %385 = vmatprep.subr.bf16.mxu0 0
        %386 = vmatpush1.bf16.msra.mxu0 0
        %387 = vmatprep.subr.bf16.mxu0 0
        %388 = vmatpush1.bf16.msra.mxu0 0
        %389 = vmatprep.subr.bf16.mxu0 0
        %390 = vmatpush1.bf16.msra.mxu0 0
        %391 = vmatprep.subr.bf16.mxu0 0
        %392 = vmatpush1.bf16.msra.mxu0 %v374
        %393 = vmatprep.subr.bf16.mxu0 0
        %394 = vmatpush1.bf16.msra.mxu0 %v373
        %395 = vmatprep.subr.bf16.mxu0 0
        %396 = vmatpush1.bf16.msra.mxu0 %v372
        %397 = vmatprep.subr.bf16.mxu0 0
        %398 = vmatpush1.bf16.msra.mxu0 %v371
        %399 = vmatprep.subr.bf16.mxu0 0
        %400 = vmatpush2.bf16.msra.mxu0 0
        %401 = vmatprep.subr.bf16.mxu0 0
        %402 = vmatpush2.bf16.msra.mxu0 0
        %403 = vmatprep.subr.bf16.mxu0 0
        %404 = vmatpush2.bf16.msra.mxu0 0
        %405 = vmatprep.subr.bf16.mxu0 0
        %406 = vmatpush2.bf16.msra.mxu0 0
        %407 = vmatprep.subr.bf16.mxu0 0
        %408 = vmatpush2.bf16.msra.mxu0 0
        %409 = vmatprep.subr.bf16.mxu0 0
        %410 = vmatpush2.bf16.msra.mxu0 0
        %411 = vmatprep.subr.bf16.mxu0 0
        %412 = vmatpush2.bf16.msra.mxu0 0
        %413 = vmatprep.subr.bf16.mxu0 0
        %414 = vmatpush2.bf16.msra.mxu0 0
        %415 = vmatprep.mubr.bf16.mxu0 0
        %416 = vmatmul.mubr.bf16.gmra.mxu0 %v381
        %v417 = vpop.f32.mrf.mxu0
        %v418 = vadd.f32 %v353, %v417
        %v419 = vpop.f32.mrf.mxu0
        %v420 = vpop.f32.mrf.mxu0
        %v421 = vpop.f32.mrf.mxu0
        %422 = vdwg.mxu0
        %v423 = vmax.f32 %v418, 0.0
        %v424 = vpack.c.bf16 %v423, %v423
        %v425 = vld [vmem:[#allocation7] sm:$0xf]
        %v426 = vld [vmem:[#allocation7 + $0x4] sm:$0xf]
        %v427 = vld [vmem:[#allocation7 + $0x8] sm:$0xf]
        %v428 = vld [vmem:[#allocation7 + $0xc] sm:$0xf]
        %v429 = vld [vmem:[#allocation7 + $0x10] sm:$0xf]
        %v430 = vld [vmem:[#allocation7 + $0x14] sm:$0xf]
        %v431 = vld [vmem:[#allocation7 + $0x18] sm:$0xf]
        %v432 = vld [vmem:[#allocation7 + $0x1c] sm:$0xf]
        %v433 = vld [vmem:[#allocation7 + $0x20] sm:$0xf]
        %v434 = vld [vmem:[#allocation7 + $0x24] sm:$0xf]
        %v435 = vld [vmem:[#allocation7 + $0x28] sm:$0xf]
        %v436 = vld [vmem:[#allocation7 + $0x2c] sm:$0xf]
        %v437 = vld [vmem:[#allocation7 + $0x30] sm:$0xf]
        %v438 = vld [vmem:[#allocation7 + $0x34] sm:$0xf]
        %v439 = vld [vmem:[#allocation7 + $0x38] sm:$0xf]
        %v440 = vld [vmem:[#allocation7 + $0x3c] sm:$0xf]
        %v441 = vld [vmem:[%s4] sm:$0x1]
        %v443 = vlaneseq
        %v444 = vshrl.u32 %v443, 7
        %v445 = vsub.s32 0, %v444
        %v446 = vrot.slane %v441, %v445
        %v464 = vunpack.c.l.b16 %v425
        %v465 = vunpack.c.l.b16 %v426
        %v466 = vunpack.c.l.b16 %v427
        %v467 = vunpack.c.l.b16 %v428
        %v468 = vunpack.c.l.b16 %v429
        %v469 = vunpack.c.l.b16 %v430
        %v470 = vunpack.c.l.b16 %v431
        %v471 = vunpack.c.l.b16 %v432
        %v472 = vunpack.c.l.b16 %v433
        %v473 = vunpack.c.l.b16 %v434
        %v474 = vunpack.c.l.b16 %v435
        %v475 = vunpack.c.l.b16 %v436
        %v476 = vunpack.c.l.b16 %v437
        %v477 = vunpack.c.l.b16 %v438
        %v478 = vunpack.c.l.b16 %v439
        %v479 = vunpack.c.l.b16 %v440
        %v480 = vpack.c.b16 %v465, %v464
        %v481 = vpack.c.b16 %v467, %v466
        %v482 = vpack.c.b16 %v469, %v468
        %v483 = vpack.c.b16 %v471, %v470
        %v484 = vpack.c.b16 %v473, %v472
        %v485 = vpack.c.b16 %v475, %v474
        %v486 = vpack.c.b16 %v477, %v476
        %v487 = vpack.c.b16 %v479, %v478
        %496 = vmatprep.subr.bf16.mxu0 0
        %497 = vmatpush1.bf16.msra.mxu0 %v487
        %498 = vmatprep.subr.bf16.mxu0 0
        %499 = vmatpush1.bf16.msra.mxu0 %v486
        %500 = vmatprep.subr.bf16.mxu0 0
        %501 = vmatpush1.bf16.msra.mxu0 %v485
        %502 = vmatprep.subr.bf16.mxu0 0
        %503 = vmatpush1.bf16.msra.mxu0 %v484
        %504 = vmatprep.subr.bf16.mxu0 0
        %505 = vmatpush1.bf16.msra.mxu0 %v483
        %506 = vmatprep.subr.bf16.mxu0 0
        %507 = vmatpush1.bf16.msra.mxu0 %v482
        %508 = vmatprep.subr.bf16.mxu0 0
        %509 = vmatpush1.bf16.msra.mxu0 %v481
        %510 = vmatprep.subr.bf16.mxu0 0
        %511 = vmatpush1.bf16.msra.mxu0 %v480
        %512 = vmatprep.subr.bf16.mxu0 0
        %513 = vmatpush2.bf16.msra.mxu0 0
        %514 = vmatprep.subr.bf16.mxu0 0
        %515 = vmatpush2.bf16.msra.mxu0 0
        %516 = vmatprep.subr.bf16.mxu0 0
        %517 = vmatpush2.bf16.msra.mxu0 0
        %518 = vmatprep.subr.bf16.mxu0 0
        %519 = vmatpush2.bf16.msra.mxu0 0
        %520 = vmatprep.subr.bf16.mxu0 0
        %521 = vmatpush2.bf16.msra.mxu0 0
        %522 = vmatprep.subr.bf16.mxu0 0
        %523 = vmatpush2.bf16.msra.mxu0 0
        %524 = vmatprep.subr.bf16.mxu0 0
        %525 = vmatpush2.bf16.msra.mxu0 0
        %526 = vmatprep.subr.bf16.mxu0 0
        %527 = vmatpush2.bf16.msra.mxu0 0
        %528 = vmatprep.mubr.bf16.mxu0 0
        %529 = vmatmul.mubr.bf16.gmra.mxu0 %v424
        %v530 = vpop.f32.mrf.mxu0
        %v531 = vadd.f32 %v446, %v530
        %v532 = vpop.f32.mrf.mxu0
        %v533 = vpop.f32.mrf.mxu0
        %v534 = vpop.f32.mrf.mxu0
        %535 = vdwg.mxu0
        %v536 = vmax.f32 %v531, 0.0
        %v537 = vpack.c.bf16 %v536, %v536
        %v538 = vld [vmem:[#allocation8] sm:$0xf]
        %v539 = vld [vmem:[#allocation8 + $0x4] sm:$0xf]
        %v540 = vld [vmem:[#allocation8 + $0x8] sm:$0xf]
        %v541 = vld [vmem:[#allocation8 + $0xc] sm:$0xf]
        %v542 = vld [vmem:[#allocation8 + $0x10] sm:$0xf]
        %v543 = vld [vmem:[#allocation8 + $0x14] sm:$0xf]
        %v544 = vld [vmem:[#allocation8 + $0x18] sm:$0xf]
        %v545 = vld [vmem:[#allocation8 + $0x1c] sm:$0xf]
        %v546 = vld [vmem:[#allocation8 + $0x20] sm:$0xf]
        %v547 = vld [vmem:[#allocation8 + $0x24] sm:$0xf]
        %v548 = vld [vmem:[#allocation8 + $0x28] sm:$0xf]
        %v549 = vld [vmem:[#allocation8 + $0x2c] sm:$0xf]
        %v550 = vld [vmem:[#allocation8 + $0x30] sm:$0xf]
        %v551 = vld [vmem:[#allocation8 + $0x34] sm:$0xf]
        %v552 = vld [vmem:[#allocation8 + $0x38] sm:$0xf]
        %v553 = vld [vmem:[#allocation8 + $0x3c] sm:$0xf]
        %v554 = vld [vmem:[%s6] sm:$0x1]
        %v556 = vlaneseq
        %v557 = vshrl.u32 %v556, 7
        %v558 = vsub.s32 0, %v557
        %v559 = vrot.slane %v554, %v558
        %v577 = vunpack.c.l.b16 %v538
        %v578 = vunpack.c.l.b16 %v539
        %v579 = vunpack.c.l.b16 %v540
        %v580 = vunpack.c.l.b16 %v541
        %v581 = vunpack.c.l.b16 %v542
        %v582 = vunpack.c.l.b16 %v543
        %v583 = vunpack.c.l.b16 %v544
        %v584 = vunpack.c.l.b16 %v545
        %v585 = vunpack.c.l.b16 %v546
        %v586 = vunpack.c.l.b16 %v547
        %v587 = vunpack.c.l.b16 %v548
        %v588 = vunpack.c.l.b16 %v549
        %v589 = vunpack.c.l.b16 %v550
        %v590 = vunpack.c.l.b16 %v551
        %v591 = vunpack.c.l.b16 %v552
        %v592 = vunpack.c.l.b16 %v553
        %v593 = vpack.c.b16 %v578, %v577
        %v594 = vpack.c.b16 %v580, %v579
        %v595 = vpack.c.b16 %v582, %v581
        %v596 = vpack.c.b16 %v584, %v583
        %v597 = vpack.c.b16 %v586, %v585
        %v598 = vpack.c.b16 %v588, %v587
        %v599 = vpack.c.b16 %v590, %v589
        %v600 = vpack.c.b16 %v592, %v591
        %609 = vmatprep.subr.bf16.mxu0 0
        %610 = vmatpush1.bf16.msra.mxu0 %v600
        %611 = vmatprep.subr.bf16.mxu0 0
        %612 = vmatpush1.bf16.msra.mxu0 %v599
        %613 = vmatprep.subr.bf16.mxu0 0
        %614 = vmatpush1.bf16.msra.mxu0 %v598
        %615 = vmatprep.subr.bf16.mxu0 0
        %616 = vmatpush1.bf16.msra.mxu0 %v597
        %617 = vmatprep.subr.bf16.mxu0 0
        %618 = vmatpush1.bf16.msra.mxu0 %v596
        %619 = vmatprep.subr.bf16.mxu0 0
        %620 = vmatpush1.bf16.msra.mxu0 %v595
        %621 = vmatprep.subr.bf16.mxu0 0
        %622 = vmatpush1.bf16.msra.mxu0 %v594
        %623 = vmatprep.subr.bf16.mxu0 0
        %624 = vmatpush1.bf16.msra.mxu0 %v593
        %625 = vmatprep.subr.bf16.mxu0 0
        %626 = vmatpush2.bf16.msra.mxu0 0
        %627 = vmatprep.subr.bf16.mxu0 0
        %628 = vmatpush2.bf16.msra.mxu0 0
        %629 = vmatprep.subr.bf16.mxu0 0
        %630 = vmatpush2.bf16.msra.mxu0 0
        %631 = vmatprep.subr.bf16.mxu0 0
        %632 = vmatpush2.bf16.msra.mxu0 0
        %633 = vmatprep.subr.bf16.mxu0 0
        %634 = vmatpush2.bf16.msra.mxu0 0
        %635 = vmatprep.subr.bf16.mxu0 0
        %636 = vmatpush2.bf16.msra.mxu0 0
        %637 = vmatprep.subr.bf16.mxu0 0
        %638 = vmatpush2.bf16.msra.mxu0 0
        %639 = vmatprep.subr.bf16.mxu0 0
        %640 = vmatpush2.bf16.msra.mxu0 0
        %641 = vmatprep.mubr.bf16.mxu0 0
        %642 = vmatmul.mubr.bf16.gmra.mxu0 %v537
        %v643 = vpop.f32.mrf.mxu0
        %v644 = vadd.f32 %v559, %v643
        %v645 = vpop.f32.mrf.mxu0
        %v646 = vpop.f32.mrf.mxu0
        %v647 = vpop.f32.mrf.mxu0
        %648 = vdwg.mxu0
        %649 = vst [vmem:[%s337] sm:$0xff] %v644
        %s650 = sand.u32 %s186, 1
        %s651 = scalar_lea.sflag [#allocation4], %s650
        %s652 = sand.u32 %s186, 1
        %s653 = smul.addr %s652, 8
        %s654 = scalar_lea.vmem [#allocation10], %s653
        // Predicated region
        $region65: #{tpu_custom_call.1} parent=47 // pred_check
          %p655 = pneg %p196
        $region66: #{tpu_custom_call.1} parent=47 // pred_check_branch
          %657 = sbr.rel (%p655) target = $region68
        $region67: #{tpu_custom_call.1} parent=47 // pred_region
          %s659 = ssub.s32 128, 128
          %660 = vsyncadd %s651, %s659
          %s661 = smul.addr %s26, 128
          %s662 = scalar_lea.hbm %s7, %s661
          %s664 = sshll.u32 %s654, 4
          %s665 = int_to_ptr.vmem [resolvable:$true] %s664
          %667 = dma.vmem_to_hbm [thread:$0]  %s665, 128, %s662, %s651
        $region68: #{tpu_custom_call.1} parent=47 // pred_fallthru
          _
      $region48: #{tpu_custom_call.1} parent=5 // pred_fallthru
        _
      %p668 = scmp.le.s32.totalorder 2, %s21
      // Predicated region
      $region69: #{tpu_custom_call.1} parent=5 // pred_check
        %p669 = pneg %p668
      $region70: #{tpu_custom_call.1} parent=5 // pred_check_branch
        %671 = sbr.rel (%p669) target = $region72
      $region71: #{tpu_custom_call.1} parent=5 // pred_region
        %s672 = ssub.s32 %s21, 2
        // Predicated region
        $region73: #{tpu_custom_call.1} parent=71 // pred_check
          %p673 = pneg %p202
        $region74: #{tpu_custom_call.1} parent=71 // pred_check_branch
          %675 = sbr.rel (%p673) target = $region76
        $region75: #{tpu_custom_call.1} parent=71 // pred_region
          %s676 = sand.u32 %s187, 1
          %s677 = scalar_lea.sflag [#allocation4], %s676
          %s678 = sand.u32 %s187, 1
          %s679 = smul.addr %s678, 8
          %s680 = scalar_lea.vmem [#allocation10], %s679
          %681 = dma.done %s677, 128
        $region76: #{tpu_custom_call.1} parent=71 // pred_fallthru
          _
      $region72: #{tpu_custom_call.1} parent=5 // pred_fallthru
        _
    $region6: #{tpu_custom_call.1} parent=1 // loop_footer
      %s25 = sadd.s32 1, %s21
    $region7: #{tpu_custom_call.1} parent=1 // loop_footer_branch
      %20 = sbr.rel target = $region3
    $region8: #{tpu_custom_call.1} parent=1 // loop_exit
      _
    %682 = vsyncpa [#allocation3], 1
    %s683 = scalar_lea.sflag [#allocation3], 1
    %684 = vsyncpa %s683, 1
    %685 = vsyncpa [#allocation6], 1
    %686 = vsyncpa [#allocation9], 1
    %687 = vsyncpa [#allocation4], 1
    %s688 = scalar_lea.sflag [#allocation4], 1
    %689 = vsyncpa %s688, 1

</llo_original>
